<compile_context>
chip_gen: v6e
topology: v6e:2x2x1
jax: 0.10.0
libtpu: 0.0.40
codegen_flags: <defaults>
</compile_context>

<pallas_src>
import functools

import jax
import jax.numpy as jnp
from jax.experimental import pallas as pl
from jax.experimental.pallas import tpu as pltpu


def _round_up(a, b):
    return (a + b - 1) // b * b


# --------------------------------------------------------------------------
# Generation-aware VMEM limit.
# --------------------------------------------------------------------------
def _vmem_limit_bytes():
    vmem_phys = 64 * 1024 * 1024
    try:
        vmem_phys = pltpu.get_tpu_info().vmem_capacity_bytes
    except Exception:
        pass
    if vmem_phys >= 96 * 1024 * 1024:      # v5e / v6e: 128 MiB physical
        return 100 * 1024 * 1024
    return 52 * 1024 * 1024                # v7x: 64 MiB physical


_VMEM_LIMIT = _vmem_limit_bytes()
_TM_CAP = 1024        # multiple of 16 (bf16 sublane packing)
_TK_CAP = 2048


# --------------------------------------------------------------------------
# Pallas kernel 1: tiled matmul + bias + activation (discriminator conv path).
#   bf16 MXU operands, f32 accumulator scratch, f32 epilogue, natural-channel
#   (lane-sliced) output store, configurable output dtype.
# --------------------------------------------------------------------------
def _conv_mm_kernel(x_ref, w_ref, b_ref, o_ref, acc_ref, *, act, neg_slope,
                    n_valid):
    @pl.when(pl.program_id(1) == 0)
    def _():
        acc_ref[...] = jnp.zeros_like(acc_ref)

    acc_ref[...] += jnp.dot(x_ref[...], w_ref[...],
                            preferred_element_type=jnp.float32)

    @pl.when(pl.program_id(1) == pl.num_programs(1) - 1)
    def _():
        acc = acc_ref[...] + b_ref[...]
        if act == "relu":
            acc = jnp.maximum(acc, 0.0)
        elif act == "leaky":
            acc = jnp.where(acc >= 0.0, acc, neg_slope * acc)
        o_ref[...] = acc[:, :n_valid].astype(o_ref.dtype)


def pallas_conv_matmul(patches, wmat, bias, n_out, *, act="none",
                       neg_slope=0.2, out_dtype=jnp.float32):
    """patches: (M, Kp) bf16, Kp % 128 == 0.  wmat: (Kp, Np) bf16, Np % 128 == 0.
    bias: (1, Np) f32.  Returns act(patches @ wmat + bias)[:, :n_out]."""
    M, Kp = patches.shape
    Np = wmat.shape[1]

    tm = M if M <= _TM_CAP else _TM_CAP
    if Kp <= _TK_CAP:
        tk = Kp
    else:
        tk = _TK_CAP
        while Kp % tk:
            tk //= 2
    grid = (pl.cdiv(M, tm), Kp // tk)

    out = pl.pallas_call(
        functools.partial(_conv_mm_kernel, act=act, neg_slope=neg_slope,
                          n_valid=n_out),
        out_shape=jax.ShapeDtypeStruct((M, n_out), out_dtype),
        grid_spec=pltpu.PrefetchScalarGridSpec(
            num_scalar_prefetch=0,
            grid=grid,
            in_specs=[pl.BlockSpec((tm, tk), lambda i, k: (i, k)),
                      pl.BlockSpec((tk, Np), lambda i, k: (k, 0)),
                      pl.BlockSpec((1, Np), lambda i, k: (0, 0))],
            out_specs=pl.BlockSpec((tm, n_out), lambda i, k: (i, 0)),
            scratch_shapes=[pltpu.VMEM((tm, Np), jnp.float32)]),
        compiler_params=pltpu.CompilerParams(
            dimension_semantics=("parallel", "arbitrary"),
            vmem_limit_bytes=_VMEM_LIMIT),
    )(patches.astype(jnp.bfloat16), wmat.astype(jnp.bfloat16), bias)
    return out


# --------------------------------------------------------------------------
# Pallas kernel 2: fused LPIPS layer.
#   For one layer: conv(+bias,ReLU) of both branches, bf16 feature writeback,
#   channel unit-normalization (EUP rsqrt), weighted squared distance and a
#   per-row-tile lane-vector partial sum -- all in a single kernel.
# --------------------------------------------------------------------------
def _lpips_layer_kernel(xc_ref, yc_ref, w_ref, b_ref, lw_ref,
                        fx_ref, fy_ref, dist_ref, *, n_valid, rows_valid, tm,
                        need_mask):
    hx = jnp.dot(xc_ref[...], w_ref[...], preferred_element_type=jnp.float32)
    hy = jnp.dot(yc_ref[...], w_ref[...], preferred_element_type=jnp.float32)
    hx = jnp.maximum(hx + b_ref[...], 0.0)
    hy = jnp.maximum(hy + b_ref[...], 0.0)
    fx_ref[...] = hx[:, :n_valid].astype(fx_ref.dtype)
    fy_ref[...] = hy[:, :n_valid].astype(fy_ref.dtype)
    # Padded channels are exactly zero (zero weight rows/cols, zero bias), so
    # they contribute nothing to the norms or to the weighted distance.
    nx = hx * jax.lax.rsqrt(jnp.sum(hx * hx, axis=1, keepdims=True) + 1e-10)
    ny = hy * jax.lax.rsqrt(jnp.sum(hy * hy, axis=1, keepdims=True) + 1e-10)
    d = (nx - ny) ** 2 * lw_ref[...]
    if need_mask:
        row = (pl.program_id(0) * tm
               + jax.lax.broadcasted_iota(jnp.int32, d.shape, 0))
        d = jnp.where(row < rows_valid, d, 0.0)
    dist_ref[...] = jnp.sum(d, axis=0, keepdims=True)[None]


def pallas_lpips_layer(xc, yc, wmat, bias, lin_w, n_out):
    """xc, yc: (M, Kp) bf16 im2col patches of the two branches.
    wmat: (Kp, Np) bf16; bias, lin_w: (1, Np) f32 (zero on padded channels).
    Returns (fx, fy) bf16 features of shape (M, n_out) and the scalar
    channel-weighted squared distance summed over all rows."""
    M, Kp = xc.shape
    Np = wmat.shape[1]
    tm = M if M <= _TM_CAP else _TM_CAP
    mt = pl.cdiv(M, tm)
    need_mask = (M % tm) != 0

    fx, fy, dist = pl.pallas_call(
        functools.partial(_lpips_layer_kernel, n_valid=n_out, rows_valid=M,
                          tm=tm, need_mask=need_mask),
        out_shape=(jax.ShapeDtypeStruct((M, n_out), jnp.bfloat16),
                   jax.ShapeDtypeStruct((M, n_out), jnp.bfloat16),
                   jax.ShapeDtypeStruct((mt, 1, Np), jnp.float32)),
        grid_spec=pltpu.PrefetchScalarGridSpec(
            num_scalar_prefetch=0,
            grid=(mt,),
            in_specs=[pl.BlockSpec((tm, Kp), lambda i: (i, 0)),
                      pl.BlockSpec((tm, Kp), lambda i: (i, 0)),
                      pl.BlockSpec((Kp, Np), lambda i: (0, 0)),   # resident
                      pl.BlockSpec((1, Np), lambda i: (0, 0)),
                      pl.BlockSpec((1, Np), lambda i: (0, 0))],
            out_specs=[pl.BlockSpec((tm, n_out), lambda i: (i, 0)),
                       pl.BlockSpec((tm, n_out), lambda i: (i, 0)),
                       pl.BlockSpec((1, 1, Np), lambda i: (i, 0, 0))]),
        compiler_params=pltpu.CompilerParams(
            dimension_semantics=("parallel",),
            vmem_limit_bytes=_VMEM_LIMIT),
    )(xc, yc, wmat, bias, lin_w)
    return fx, fy, jnp.sum(dist)


# --------------------------------------------------------------------------
# Pallas kernel 3: sum of |x - y| with a parallel outer axis (v7x megacore),
# an accumulating (1,1,128) output block per core and in-kernel tail masking.
# --------------------------------------------------------------------------
def _abs_sum_kernel(x_ref, y_ref, o_ref, *, tr, T, rows_valid, need_mask):
    p = pl.program_id(0)
    t = pl.program_id(1)

    @pl.when(t == 0)
    def _():
        o_ref[...] = jnp.zeros_like(o_ref)

    d = jnp.abs(x_ref[...] - y_ref[...])
    if need_mask:
        row = ((p * T + t) * tr
               + jax.lax.broadcasted_iota(jnp.int32, d.shape, 0))
        d = jnp.where(row < rows_valid, d, 0.0)
    o_ref[...] += jnp.sum(d, axis=0, keepdims=True)[None]


def pallas_abs_mean(x, y):
    """mean(|x - y|) over all elements."""
    n = x.size
    lanes = 128
    xf = x.reshape(-1).astype(jnp.float32)
    yf = y.reshape(-1).astype(jnp.float32)
    if n % lanes:
        # TODO(synk): ragged (non-128-multiple) element counts pay one small
        # XLA pad; aligned sizes stream straight from a free reshape.
        pad = lanes - n % lanes
        xf = jnp.pad(xf, (0, pad))
        yf = jnp.pad(yf, (0, pad))
    rows = xf.size // lanes
    x2 = xf.reshape(rows, lanes)
    y2 = yf.reshape(rows, lanes)

    if rows <= 2048:
        tr, nt = rows, 1
    else:
        tr = 1024
        nt = pl.cdiv(rows, tr)
    P = 2 if nt >= 4 else 1
    T = pl.cdiv(nt, P)
    need_mask = (P * T * tr) != rows

    def idx(p, t):
        return (jnp.minimum(p * T + t, nt - 1), 0)

    partial = pl.pallas_call(
        functools.partial(_abs_sum_kernel, tr=tr, T=T, rows_valid=rows,
                          need_mask=need_mask),
        out_shape=jax.ShapeDtypeStruct((P, 1, lanes), jnp.float32),
        grid_spec=pltpu.PrefetchScalarGridSpec(
            num_scalar_prefetch=0,
            grid=(P, T),
            in_specs=[pl.BlockSpec((tr, lanes), idx),
                      pl.BlockSpec((tr, lanes), idx)],
            out_specs=pl.BlockSpec((1, 1, lanes), lambda p, t: (p, 0, 0))),
        compiler_params=pltpu.CompilerParams(
            dimension_semantics=("parallel", "arbitrary"),
            vmem_limit_bytes=_VMEM_LIMIT),
    )(x2, y2)
    return jnp.sum(partial) / n


# --------------------------------------------------------------------------
# Conv glue: im2col (XLA data movement) with K-padding folded into the concat.
# TODO(synk): fuse im2col into the Pallas matmul k-loop (accumulate KH*KW taps
#             over strided NHWC bands) to remove the patch-expansion HBM pass.
# --------------------------------------------------------------------------
def _im2col(x_nhwc, kh, kw, stride, pad, k_align=128):
    N, H, W, C = x_nhwc.shape
    xp = jnp.pad(x_nhwc, ((0, 0), (pad, pad), (pad, pad), (0, 0)))
    Ho = (H + 2 * pad - kh) // stride + 1
    Wo = (W + 2 * pad - kw) // stride + 1
    cols = []
    for i in range(kh):
        for j in range(kw):
            cols.append(xp[:, i:i + stride * (Ho - 1) + 1:stride,
                           j:j + stride * (Wo - 1) + 1:stride, :])
    K = kh * kw * C
    Kp = _round_up(K, k_align)
    if Kp > K:
        cols.append(jnp.zeros((N, Ho, Wo, Kp - K), x_nhwc.dtype))
    patches = jnp.concatenate(cols, axis=-1)           # (N, Ho, Wo, Kp)
    return patches.reshape(N * Ho * Wo, Kp), (N, Ho, Wo), K


def _pad_weights(w_oihw, bias, Kp, Np):
    Cout, Cin, KH, KW = w_oihw.shape
    K = KH * KW * Cin
    wmat = jnp.transpose(w_oihw, (2, 3, 1, 0)).reshape(K, Cout)
    wmat = jnp.zeros((Kp, Np), jnp.bfloat16).at[:K, :Cout].set(
        wmat.astype(jnp.bfloat16))
    b = jnp.zeros((1, Np), jnp.float32).at[0, :Cout].set(
        bias.astype(jnp.float32))
    return wmat, b


def conv2d(x_nhwc, w_oihw, bias, stride, pad, *, act="none", neg_slope=0.2,
           out_dtype=jnp.float32):
    """PyTorch-style Conv2d (OIHW weights) on an NHWC tensor via Pallas MXU."""
    Cout = w_oihw.shape[0]
    patches, (N, Ho, Wo), _ = _im2col(x_nhwc.astype(jnp.bfloat16),
                                      w_oihw.shape[2], w_oihw.shape[3],
                                      stride, pad)
    Kp = patches.shape[1]
    Np = _round_up(Cout, 128)
    wmat, b = _pad_weights(w_oihw, bias, Kp, Np)
    out = pallas_conv_matmul(patches, wmat, b, Cout, act=act,
                             neg_slope=neg_slope, out_dtype=out_dtype)
    return out.reshape(N, Ho, Wo, Cout)


def _batchnorm_leaky(x_nhwc, gamma, beta, neg_slope=0.2, eps=1e-5, groups=1):
    # training-mode BatchNorm2d; `groups` splits the batch so the concatenated
    # real/fake pass keeps per-call statistics (semantics of two disc calls).
    # TODO(synk): emit per-half sum / sum-of-squares from the producing conv's
    #             epilogue and fold scale/shift+leaky into the next patch load
    #             to remove this XLA pointwise pass.
    N, H, W, C = x_nhwc.shape
    xg = x_nhwc.astype(jnp.float32).reshape(groups, N // groups, H, W, C)
    mean = jnp.mean(xg, axis=(1, 2, 3), keepdims=True)
    var = jnp.mean((xg - mean) ** 2, axis=(1, 2, 3), keepdims=True)
    h = (xg - mean) * jax.lax.rsqrt(var + eps) * gamma + beta
    h = h.reshape(N, H, W, C)
    h = jnp.where(h >= 0.0, h, neg_slope * h)
    return h.astype(jnp.bfloat16)


# --------------------------------------------------------------------------
# Sub-modules: simplified LPIPS (squeeze-style backbone, synthetic weights)
# and a PatchGAN NLayerDiscriminator (ndf=16, n_layers=2).
# --------------------------------------------------------------------------
# TODO(synk): the real torchmetrics LPIPS uses a pretrained SqueezeNet; the
# structure is reproduced (strided convs + ReLU, channel unit-norm, nonneg lin
# weights, spatial mean, batch mean) with deterministic synthetic weights.
def lpips_perceptual_loss(params, x_nchw, y_nchw):
    shift = params["lpips_shift"]
    scale = params["lpips_scale"]
    fx = jnp.transpose((x_nchw - shift) / scale, (0, 2, 3, 1)).astype(jnp.bfloat16)
    fy = jnp.transpose((y_nchw - shift) / scale, (0, 2, 3, 1)).astype(jnp.bfloat16)
    total = jnp.float32(0.0)
    for l in range(3):
        w = params[f"lpips_conv{l}_w"]
        b = params[f"lpips_conv{l}_b"]
        lw = params[f"lpips_lin{l}"]
        Co = w.shape[0]
        xc, (N, Ho, Wo), _ = _im2col(fx, 3, 3, 2, 1)
        yc, _, _ = _im2col(fy, 3, 3, 2, 1)
        Kp = xc.shape[1]
        Np = _round_up(Co, 128)
        wmat, bp = _pad_weights(w, b, Kp, Np)
        lwp = jnp.zeros((1, Np), jnp.float32).at[0, :Co].set(lw)
        fxm, fym, dsum = pallas_lpips_layer(xc, yc, wmat, bp, lwp, Co)
        M = N * Ho * Wo
        total = total + dsum / M       # mean over batch & space, weighted ch-sum
        fx = fxm.reshape(N, Ho, Wo, Co)
        fy = fym.reshape(N, Ho, Wo, Co)
    return total


def discriminator(params, x_nchw, bn_groups=1):
    x = jnp.transpose(x_nchw, (0, 2, 3, 1))
    h = conv2d(x, params["d_conv0_w"], params["d_conv0_b"], 2, 1,
               act="leaky", out_dtype=jnp.bfloat16)
    h = conv2d(h, params["d_conv1_w"], jnp.zeros((32,), jnp.float32), 2, 1,
               out_dtype=jnp.bfloat16)
    h = _batchnorm_leaky(h, params["d_bn1_g"], params["d_bn1_b"],
                         groups=bn_groups)
    h = conv2d(h, params["d_conv2_w"], jnp.zeros((64,), jnp.float32), 1, 1,
               out_dtype=jnp.bfloat16)
    h = _batchnorm_leaky(h, params["d_bn2_g"], params["d_bn2_b"],
                         groups=bn_groups)
    logits = conv2d(h, params["d_conv3_w"], params["d_conv3_b"], 1, 1,
                    out_dtype=jnp.float32)
    return jnp.transpose(logits, (0, 3, 1, 2))   # back to NCHW logits


# --------------------------------------------------------------------------
# Loss helpers (match the reference PyTorch functions).
# --------------------------------------------------------------------------
def adopt_weight(weight, global_step, threshold=0, value=0.0):
    return jnp.where(global_step < threshold, value, weight)   # jit-safe


def hinge_d_loss(logits_real, logits_fake):
    return 0.5 * (jnp.mean(jnp.maximum(1.0 - logits_real, 0.0))
                  + jnp.mean(jnp.maximum(1.0 + logits_fake, 0.0)))


def hinge_g_loss(logits_fake):
    return -jnp.mean(logits_fake)


# --------------------------------------------------------------------------
# VQLPIPSWithDiscriminator.forward
# --------------------------------------------------------------------------
def vqlpips_forward(params, cfg, codebook_loss, inputs, reconstructions,
                    optimizer_idx, global_step, last_layer=None, cond=None,
                    split="train", gate=None):
    inputs = inputs.astype(jnp.float32)
    reconstructions = reconstructions.astype(jnp.float32)

    rec_abs_mean = pallas_abs_mean(inputs, reconstructions)
    if cfg["perceptual_weight"] > 0:
        p_loss = lpips_perceptual_loss(params, inputs, reconstructions)
    else:
        p_loss = jnp.float32(0.0)
    # mean(|x-y| + pw * p_loss) == mean|x-y| + pw * p_loss  (p_loss is scalar)
    nll_loss = rec_abs_mean + cfg["perceptual_weight"] * p_loss
    rec_loss_mean = nll_loss

    if optimizer_idx == 0:
        disc_in = reconstructions if cond is None else jnp.concatenate(
            [reconstructions, cond], axis=1)
        logits_fake = discriminator(params, disc_in)
        g_loss = hinge_g_loss(logits_fake)

        if cfg["disc_adaptive_loss"]:
            # TODO(synk): adaptive d_weight needs autograd grads of nll/g_loss
            # w.r.t. the decoder's last_layer, unreachable from this synthetic
            # forward; fall back to the max weight.
            d_weight = jnp.float32(cfg["disc_weight_max"])
        else:
            d_weight = jnp.float32(cfg["disc_weight_max"])
        if cfg["disc_weight_max"] is not None:
            d_weight = jnp.minimum(d_weight, cfg["disc_weight_max"])

        disc_factor = adopt_weight(cfg["disc_factor"], global_step,
                                   threshold=cfg["disc_start"])
        loss = (nll_loss + d_weight * disc_factor * g_loss
                + cfg["codebook_weight"] * jnp.mean(codebook_loss))
        log_dict = {
            f"{split}_total_loss": loss,
            f"{split}_quant_loss": jnp.mean(codebook_loss),
            f"{split}_nll_loss": nll_loss,
            f"{split}_rec_loss": rec_loss_mean,
            f"{split}_p_loss": p_loss,
            f"{split}_d_weight": d_weight,
            f"{split}_disc_factor": jnp.asarray(disc_factor, jnp.float32),
            f"{split}_g_loss": g_loss,
            f"{split}_budget_loss": None,   # budget_loss_config=None
        }
        return loss, log_dict

    if optimizer_idx == 1:
        real_in = inputs if cond is None else jnp.concatenate([inputs, cond], 1)
        fake_in = reconstructions if cond is None else jnp.concatenate(
            [reconstructions, cond], 1)
        B = real_in.shape[0]
        # single discriminator pass over [real; fake]; BN stats kept per half
        both = jnp.concatenate([jax.lax.stop_gradient(real_in),
                                jax.lax.stop_gradient(fake_in)], axis=0)
        logits = discriminator(params, both, bn_groups=2)
        logits_real, logits_fake = logits[:B], logits[B:]
        disc_factor = adopt_weight(cfg["disc_factor"], global_step,
                                   threshold=cfg["disc_start"])
        d_loss = disc_factor * hinge_d_loss(logits_real, logits_fake)
        log_dict = {
            f"{split}_disc_loss": d_loss,
            f"{split}_logits_real": jnp.mean(logits_real),
            f"{split}_logits_fake": jnp.mean(logits_fake),
        }
        return d_loss, log_dict


# --------------------------------------------------------------------------
# Deterministic synthetic parameter init.
# --------------------------------------------------------------------------
def init_params(key):
    ks = jax.random.split(key, 16)
    p = {}
    p["lpips_shift"] = jnp.array([-0.030, -0.088, -0.188],
                                 jnp.float32).reshape(1, 3, 1, 1)
    p["lpips_scale"] = jnp.array([0.458, 0.448, 0.450],
                                 jnp.float32).reshape(1, 3, 1, 1)
    lpips_chs = [(16, 3), (32, 16), (64, 32)]
    for l, (co, ci) in enumerate(lpips_chs):
        p[f"lpips_conv{l}_w"] = 0.1 * jax.random.normal(ks[l], (co, ci, 3, 3),
                                                        jnp.float32)
        p[f"lpips_conv{l}_b"] = jnp.zeros((co,), jnp.float32)
        p[f"lpips_lin{l}"] = jnp.abs(
            0.1 * jax.random.normal(ks[3 + l], (co,), jnp.float32))
    p["d_conv0_w"] = 0.02 * jax.random.normal(ks[6], (16, 3, 4, 4), jnp.float32)
    p["d_conv0_b"] = jnp.zeros((16,), jnp.float32)
    p["d_conv1_w"] = 0.02 * jax.random.normal(ks[7], (32, 16, 4, 4), jnp.float32)
    p["d_bn1_g"] = 1.0 + 0.02 * jax.random.normal(ks[8], (32,), jnp.float32)
    p["d_bn1_b"] = jnp.zeros((32,), jnp.float32)
    p["d_conv2_w"] = 0.02 * jax.random.normal(ks[9], (64, 32, 4, 4), jnp.float32)
    p["d_bn2_g"] = 1.0 + 0.02 * jax.random.normal(ks[10], (64,), jnp.float32)
    p["d_bn2_b"] = jnp.zeros((64,), jnp.float32)
    p["d_conv3_w"] = 0.02 * jax.random.normal(ks[11], (1, 64, 4, 4), jnp.float32)
    p["d_conv3_b"] = jnp.zeros((1,), jnp.float32)
    return p


if __name__ == "__main__":
    key = jax.random.PRNGKey(0)
    k0, k1, k2, k3 = jax.random.split(key, 4)

    params = init_params(k0)
    cfg = dict(
        disc_start=0, codebook_weight=1.0, pixelloss_weight=1.0,
        disc_factor=1.0, disc_weight=1.0, perceptual_weight=1.0,
        disc_conditional=False, disc_adaptive_loss=False, disc_loss="hinge",
        disc_weight_max=1.0,
    )

    inputs = jnp.tanh(jax.random.normal(k1, (2, 3, 16, 16), jnp.float32))
    reconstructions = jnp.tanh(jax.random.normal(k2, (2, 3, 16, 16),
                                                 jnp.float32))
    codebook_loss = jnp.abs(jax.random.normal(k3, (1,), jnp.float32))
    last_layer = jnp.zeros((3, 16, 3, 3), jnp.float32)   # dummy decoder weight

    # generator step (optimizer_idx = 0)
    loss_g, log_g = vqlpips_forward(params, cfg, codebook_loss, inputs,
                                    reconstructions, optimizer_idx=0,
                                    global_step=1, last_layer=last_layer)
    # discriminator step (optimizer_idx = 1)
    loss_d, log_d = vqlpips_forward(params, cfg, codebook_loss, inputs,
                                    reconstructions, optimizer_idx=1,
                                    global_step=1, last_layer=last_layer)

    jax.block_until_ready((loss_g, loss_d))
    assert jnp.isfinite(loss_g) and jnp.isfinite(loss_d)
    print("KERNEL_OK")
</pallas_src>

<mosaic_0001>
module attributes {stable_mosaic.version = 11 : i64} {
  func.func @_abs_sum_kernel(%arg0: i32, %arg1: i32, %arg2: memref<12x128xf32, #tpu.memory_space<vmem>>, %arg3: memref<12x128xf32, #tpu.memory_space<vmem>>, %arg4: memref<1x1x128xf32, #tpu.memory_space<vmem>>) attributes {dimension_semantics = [#tpu.dimension_semantics<parallel>, #tpu.dimension_semantics<arbitrary>], iteration_bounds = array<i64: 1, 1>, scalar_prefetch = 0 : i64, scratch_operands = 0 : i64, tpu.core_type = #tpu.core_type<tc>, window_params = [{transform_indices = @transform_0, window_bounds = array<i64: 12, 128>}, {transform_indices = @transform_1, window_bounds = array<i64: 12, 128>}, {transform_indices = @transform_2, window_bounds = array<i64: 1, 1, 128>}]} {
    %c0_i32 = arith.constant 0 : i32
    %0 = arith.cmpi eq, %arg1, %c0_i32 : i32
    %1 = arith.extui %0 : i1 to i32
    %c0_i32_0 = arith.constant 0 : i32
    %2 = arith.cmpi ne, %1, %c0_i32_0 : i32
    scf.if %2 {
      %cst_10 = arith.constant 0.000000e+00 : f32
      %13 = vector.broadcast %cst_10 : f32 to vector<1x1x128xf32>
      %c0_11 = arith.constant 0 : index
      %c0_12 = arith.constant 0 : index
      %c0_13 = arith.constant 0 : index
      %14 = vector.load %arg4[%c0_11, %c0_12, %c0_13] : memref<1x1x128xf32, #tpu.memory_space<vmem>>, vector<1x1x128xf32>
      tpu.vector_store %arg4[%c0_11, %c0_12, %c0_13], %13 {strides = array<i32>} : memref<1x1x128xf32, #tpu.memory_space<vmem>>, vector<1x1x128xf32>,
    } else {
    }
    %c0 = arith.constant 0 : index
    %c0_1 = arith.constant 0 : index
    %3 = vector.load %arg2[%c0, %c0_1] : memref<12x128xf32, #tpu.memory_space<vmem>>, vector<12x128xf32>
    %c0_2 = arith.constant 0 : index
    %c0_3 = arith.constant 0 : index
    %4 = vector.load %arg3[%c0_2, %c0_3] : memref<12x128xf32, #tpu.memory_space<vmem>>, vector<12x128xf32>
    %5 = arith.subf %3, %4 : vector<12x128xf32>
    %6 = math.absf %5 : vector<12x128xf32>
    %c0_4 = arith.constant 0 : index
    %c0_5 = arith.constant 0 : index
    %c0_6 = arith.constant 0 : index
    %7 = vector.load %arg4[%c0_4, %c0_5, %c0_6] : memref<1x1x128xf32, #tpu.memory_space<vmem>>, vector<1x1x128xf32>
    %cst = arith.constant dense<0.000000e+00> : vector<128xf32>
    %8 = vector.multi_reduction <add>, %6, %cst [0] : vector<12x128xf32> to vector<128xf32>
    %9 = vector.shape_cast %8 : vector<128xf32> to vector<1x128xf32>
    %10 = vector.shape_cast %9 : vector<1x128xf32> to vector<1x1x128xf32>
    %11 = arith.addf %7, %10 : vector<1x1x128xf32>
    %c0_7 = arith.constant 0 : index
    %c0_8 = arith.constant 0 : index
    %c0_9 = arith.constant 0 : index
    %12 = vector.load %arg4[%c0_7, %c0_8, %c0_9] : memref<1x1x128xf32, #tpu.memory_space<vmem>>, vector<1x1x128xf32>
    tpu.vector_store %arg4[%c0_7, %c0_8, %c0_9], %11 {strides = array<i32>} : memref<1x1x128xf32, #tpu.memory_space<vmem>>, vector<1x1x128xf32>,
    return
  }
  func.func @transform_0(%arg0: i32, %arg1: i32) -> (i32, i32) {
    %c1_i32 = arith.constant 1 : i32
    %0 = arith.muli %arg0, %c1_i32 : i32
    %1 = arith.addi %0, %arg1 : i32
    %c0_i32 = arith.constant 0 : i32
    %2 = arith.minsi %1, %c0_i32 : i32
    %c0_i32_0 = arith.constant 0 : i32
    %c0_i32_1 = arith.constant 0 : i32
    return %2, %c0_i32_0 : i32, i32
  }
  func.func @transform_1(%arg0: i32, %arg1: i32) -> (i32, i32) {
    %c1_i32 = arith.constant 1 : i32
    %0 = arith.muli %arg0, %c1_i32 : i32
    %1 = arith.addi %0, %arg1 : i32
    %c0_i32 = arith.constant 0 : i32
    %2 = arith.minsi %1, %c0_i32 : i32
    %c0_i32_0 = arith.constant 0 : i32
    %c0_i32_1 = arith.constant 0 : i32
    return %2, %c0_i32_0 : i32, i32
  }
  func.func @transform_2(%arg0: i32, %arg1: i32) -> (i32, i32, i32) {
    %c0_i32 = arith.constant 0 : i32
    %c0_i32_0 = arith.constant 0 : i32
    %c0_i32_1 = arith.constant 0 : i32
    return %arg0, %c0_i32, %c0_i32_0 : i32, i32, i32
  }
}

</mosaic_0001>

<llo_original>
// kernel: tpu_custom_call.1
$region0: #{tpu_custom_call.1}
  #allocation0 [shape = 'u32[]', space=smem, size = 0x4, offset = 0x4, fixed_abs, tag = 'smem constant byte address 0x4 - core index']
  #allocation1 [shape = 'u32[144,128]{1,0:T(1,128)}', space=vmem, size = 0x12000, scoped, tag = 'internal scratch']
  %s0 = inlined_call_operand.hbm [shape: f32[12,128], index: 0, kind: input, shape index: {}]
  %s1 = inlined_call_operand.hbm [shape: f32[12,128], index: 1, kind: input, shape index: {}]
  %s2 = inlined_call_operand.hbm [shape: f32[1,1,128], index: 2, kind: output, shape index: {}]
  %s3 = sld [smem:[#allocation0]]
  $region30: #{tpu_custom_call.1} parent=0
    _
  %s5 = ssub.s32 1, %s3
  %s6 = scalar_select 0, %s5, %s3
  $region1: #{tpu_custom_call.1} parent=0
    #allocation2 [shape = 'u8[8192]{0}', space=vmem, size = 0x2000, scoped, tag = 'input window, operand 0, single buffered']
    #allocation3 [shape = 's32[1]{0}', space=sflag, size = 0x4, scoped, tag = 'scoped memory for tpu_custom_call.1']
    #allocation4 [shape = 's32[1]{0}', space=sflag, size = 0x4, scoped, tag = 'scoped memory for tpu_custom_call.1']
    #allocation5 [shape = 'u8[8192]{0}', space=vmem, size = 0x2000, scoped, tag = 'input window, operand 1, single buffered']
    #allocation6 [shape = 's32[1]{0}', space=sflag, size = 0x4, scoped, tag = 'scoped memory for tpu_custom_call.1']
    #allocation7 [shape = 'u8[512]{0}', space=vmem, size = 0x400, scoped, tag = 'output window, operand 0, single buffered']
    %7 = vsyncpa [#allocation3], 0
    %8 = vsyncpa [#allocation6], 0
    %9 = vsyncpa [#allocation4], 0
    // Predicated region
    $region2: #{tpu_custom_call.1} parent=1 // pred_check
      _
    $region3: #{tpu_custom_call.1} parent=1 // pred_check_branch
      %11 = sbr.rel (0) target = $region5
    $region4: #{tpu_custom_call.1} parent=1 // pred_region
      %s12 = sadd.s32 0, 0
      %p13 = scmp.lt.s32.totalorder %s12, 0
      %s14 = scalar_select %p13, %s12, 0
      %s15 = smul.u32 2, %s14
      %s17 = ssub.s32 256, 256
      %18 = vsyncadd [#allocation3], %s17
      %s19 = smul.addr %s15, 128
      %s20 = scalar_lea.hbm %s0, %s19
      %s21 = sshll.u32 [#allocation2], 4
      %s22 = int_to_ptr.vmem [resolvable:$true] %s21
      %27 = dma.hbm_to_vmem [thread:$0]  %s20, 256, %s22, [#allocation3], 128, 128, 8
    $region5: #{tpu_custom_call.1} parent=1 // pred_fallthru
      _
    // Predicated region
    $region6: #{tpu_custom_call.1} parent=1 // pred_check
      _
    $region7: #{tpu_custom_call.1} parent=1 // pred_check_branch
      %29 = sbr.rel (0) target = $region9
    $region8: #{tpu_custom_call.1} parent=1 // pred_region
      %s30 = sadd.s32 0, 0
      %p31 = scmp.lt.s32.totalorder %s30, 0
      %s32 = scalar_select %p31, %s30, 0
      %s33 = smul.u32 2, %s32
      %s35 = ssub.s32 256, 256
      %36 = vsyncadd [#allocation6], %s35
      %s37 = smul.addr %s33, 128
      %s38 = scalar_lea.hbm %s1, %s37
      %s39 = sshll.u32 [#allocation5], 4
      %s40 = int_to_ptr.vmem [resolvable:$true] %s39
      %45 = dma.hbm_to_vmem [thread:$0]  %s38, 256, %s40, [#allocation6], 128, 128, 8
    $region9: #{tpu_custom_call.1} parent=1 // pred_fallthru
      _
    // Predicated region
    $region10: #{tpu_custom_call.1} parent=1 // pred_check
      _
    $region11: #{tpu_custom_call.1} parent=1 // pred_check_branch
      %47 = sbr.rel (0) target = $region13
    $region12: #{tpu_custom_call.1} parent=1 // pred_region
      %48 = dma.done [#allocation3], 256
    $region13: #{tpu_custom_call.1} parent=1 // pred_fallthru
      _
    // Predicated region
    $region14: #{tpu_custom_call.1} parent=1 // pred_check
      _
    $region15: #{tpu_custom_call.1} parent=1 // pred_check_branch
      %50 = sbr.rel (0) target = $region17
    $region16: #{tpu_custom_call.1} parent=1 // pred_region
      %51 = dma.done [#allocation6], 256
    $region17: #{tpu_custom_call.1} parent=1 // pred_fallthru
      _
    %s52 = sadd.s32 0, 0
    %p53 = scmp.lt.s32.totalorder %s52, 0
    %s54 = scalar_select %p53, %s52, 0
    %s55 = smul.u32 2, %s54
    %s56 = sadd.s32 0, 0
    %p57 = scmp.lt.s32.totalorder %s56, 0
    %s58 = scalar_select %p57, %s56, 0
    %s59 = smul.u32 2, %s58
    %p60 = scmp.eq.s32.totalorder 0, 0
    // Predicated region
    $region18: #{tpu_custom_call.1} parent=1 // pred_check
      %p61 = pneg %p60
    $region19: #{tpu_custom_call.1} parent=1 // pred_check_branch
      %63 = sbr.rel (%p61) target = $region21
    $region20: #{tpu_custom_call.1} parent=1 // pred_region
      %64 = vst [vmem:[#allocation7] sm:$0x1] 0.0
    $region21: #{tpu_custom_call.1} parent=1 // pred_fallthru
      _
    %v65 = vld [vmem:[#allocation2] sm:$0xff]
    %v66 = vld [vmem:[#allocation2 + $0x8] sm:$0xf]
    %v67 = vld [vmem:[#allocation5] sm:$0xff]
    %v68 = vld [vmem:[#allocation5 + $0x8] sm:$0xf]
    %v69 = vsub.f32 %v65, %v67
    %v70 = vsub.f32 %v66, %v68
    %v71 = vand.u32 2147483647, %v69
    %v72 = vand.u32 2147483647, %v70
    %v73 = vld [vmem:[#allocation7] sm:$0x1]
    %vm74 = vcmask 1043456
    %v75 = vsel %vm74, %v72, 0.0
    %v76 = vadd.f32 %v71, %v75
    %v77 = vrot.slane %v76, 4
    %v78 = vadd.f32 %v76, %v77
    %v79 = vrot.slane %v78, 2
    %v80 = vadd.f32 %v78, %v79
    %v81 = vrot.slane %v80, 1
    %v82 = vadd.f32 %v80, %v81
    %v83 = vadd.f32 %v73, %v82
    %84 = vst [vmem:[#allocation7] sm:$0x1] %v83
    // Predicated region
    $region22: #{tpu_custom_call.1} parent=1 // pred_check
      _
    $region23: #{tpu_custom_call.1} parent=1 // pred_check_branch
      %86 = sbr.rel (0) target = $region25
    $region24: #{tpu_custom_call.1} parent=1 // pred_region
      %s88 = ssub.s32 16, 16
      %89 = vsyncadd [#allocation4], %s88
      %s91 = sshll.u32 [#allocation7], 4
      %s92 = int_to_ptr.vmem [resolvable:$true] %s91
      %94 = dma.vmem_to_hbm [thread:$0]  %s92, 16, %s2, [#allocation4]
    $region25: #{tpu_custom_call.1} parent=1 // pred_fallthru
      _
    // Predicated region
    $region26: #{tpu_custom_call.1} parent=1 // pred_check
      _
    $region27: #{tpu_custom_call.1} parent=1 // pred_check_branch
      %96 = sbr.rel (0) target = $region29
    $region28: #{tpu_custom_call.1} parent=1 // pred_region
      %97 = dma.done [#allocation4], 16
    $region29: #{tpu_custom_call.1} parent=1 // pred_fallthru
      _
    %98 = vsyncpa [#allocation3], 1
    %99 = vsyncpa [#allocation6], 1
    %100 = vsyncpa [#allocation4], 1

</llo_original>
